<compile_context>
chip_gen: v6e
topology: v6e:2x2x1
jax: 0.10.0
libtpu: 0.0.40
codegen_flags: <defaults>
</compile_context>

<pallas_src>
import jax
import jax.numpy as jnp
from jax.experimental import pallas as pl
from jax.experimental.pallas import tpu as pltpu


def au_classifier_kernel(x_ref, wm_ref, b_ref, o_ref):
    # x_ref : (block_bs, K)   activation tile, K = seq*C (lane-dense)
    # wm_ref: (seq, K)        block-diagonal masked weight (VMEM-resident)
    # b_ref : (seq, 1)        f32 bias column (broadcast over the lane/batch axis)
    # o_ref : (seq, block_bs) transposed output tile (batch on lanes)
    ip = jax.lax.dot_general(
        wm_ref[...], x_ref[...],
        dimension_numbers=(((1,), (1,)), ((), ())),   # contract K with K (A @ B.T)
        preferred_element_type=jnp.float32,           # f32 accumulation
        precision=jax.lax.Precision.HIGHEST,
    )                                                 # -> (seq, block_bs)
    o_ref[...] = (ip + b_ref[...]).astype(o_ref.dtype)


def au_classifier(seq_input, weight, bias):
    """seq_input: (bs, seq_len, in_ch); weight: (out_ch, in_ch); bias: (out_ch,)."""
    bs, seq_len, in_ch = seq_input.shape
    out_ch, w_in = weight.shape
    assert w_in == in_ch
    # The PyTorch reshape/bmm trick only type-checks when seq_len == out_channels.
    assert seq_len == out_ch, "AUClassifier.forward requires seq_len == out_channels"

    K = seq_len * in_ch
    dtype = seq_input.dtype

    # Block-diagonal masked weight: Wm[s, s'*C + c] = weight[s, c] if s' == s else 0.
    wm = (jnp.eye(seq_len, dtype=weight.dtype)[:, :, None] * weight[None, :, :])
    wm = wm.reshape(seq_len, K).astype(dtype)
    bias_col = bias.astype(jnp.float32).reshape(seq_len, 1)

    # Flatten (seq, C) -> K.  Contiguous, so this is free layout plumbing.
    x2 = seq_input.reshape(bs, K)

    # Batch tile selection:
    #  - lane-dense output stores want block_bs % 128 == 0 (or the full padded batch),
    #  - VMEM wants the streamed activation tile <= ~4 MiB so the double-buffered
    #    pipeline stays far below the 32 MiB scoped-VMEM default (v7x included).
    if bs >= 256:
        bytes_per_row = K * x2.dtype.itemsize
        budget_rows = max(128, (4 * 1024 * 1024) // bytes_per_row)
        block_bs = (min(512, budget_rows, bs) // 128) * 128
    else:
        block_bs = ((bs + 7) // 8) * 8      # single sublane-aligned tile
    padded_bs = ((bs + block_bs - 1) // block_bs) * block_bs
    if padded_bs != bs:
        x2 = jnp.pad(x2, ((0, padded_bs - bs), (0, 0)))
    grid = (padded_bs // block_bs,)

    out_t = pl.pallas_call(
        au_classifier_kernel,
        out_shape=jax.ShapeDtypeStruct((seq_len, padded_bs), dtype),
        grid=grid,
        in_specs=[
            pl.BlockSpec((block_bs, K), lambda i: (i, 0)),   # stream batch tiles
            pl.BlockSpec((seq_len, K), lambda i: (0, 0)),    # resident masked weight
            pl.BlockSpec((seq_len, 1), lambda i: (0, 0)),    # resident bias column
        ],
        out_specs=pl.BlockSpec((seq_len, block_bs), lambda i: (0, i)),
        compiler_params=pltpu.CompilerParams(
            dimension_semantics=("parallel",),   # megacore-shard the batch axis (v7x)
        ),
    )(x2, wm, bias_col)

    # (seq, padded_bs) -> (bs, seq): trim batch padding, transpose in the wrapper.
    return out_t[:, :bs].T


def _reference(seq_input, weight, bias):
    # Pure-JAX reference of the PyTorch semantics (elementwise, exact f32).
    return jnp.sum(seq_input * weight[None, :, :], axis=-1) + bias[None, :]


if __name__ == "__main__":
    key = jax.random.PRNGKey(0)

    def make_inputs(k, bs, seq_len, in_channels):
        kx, kw, kb = jax.random.split(k, 3)
        x = jax.random.normal(kx, (bs, seq_len, in_channels), dtype=jnp.float32)
        # Deterministic nn.Linear-style init: U(-1/sqrt(in), 1/sqrt(in)).
        bound = 1.0 / (in_channels ** 0.5)
        w = jax.random.uniform(kw, (seq_len, in_channels), jnp.float32, -bound, bound)
        b = jax.random.uniform(kb, (seq_len,), jnp.float32, -bound, bound)
        return x, w, b

    k1, k2 = jax.random.split(key)

    # Small shapes implied by the forward (seq_len == out_channels).
    x, w, b = make_inputs(k1, 2, 8, 32)
    out = jax.block_until_ready(au_classifier(x, w, b))
    ref = _reference(x, w, b)
    assert out.shape == (2, 8)
    assert jnp.allclose(out, ref, atol=1e-4, rtol=1e-4)

    # Larger batch: exercises the gridded, lane-dense (block_bs % 128 == 0) path
    # with batch padding and the parallel grid axis.
    x, w, b = make_inputs(k2, 300, 8, 32)
    out = jax.block_until_ready(au_classifier(x, w, b))
    ref = _reference(x, w, b)
    assert out.shape == (300, 8)
    assert jnp.allclose(out, ref, atol=1e-4, rtol=1e-4)

    print("KERNEL_OK")
</pallas_src>

<mosaic_0001>
module attributes {stable_mosaic.version = 11 : i64} {
  func.func @au_classifier_kernel(%arg0: i32, %arg1: memref<8x256xf32, #tpu.memory_space<vmem>>, %arg2: memref<8x256xf32, #tpu.memory_space<vmem>>, %arg3: memref<8x1xf32, #tpu.memory_space<vmem>>, %arg4: memref<8x8xf32, #tpu.memory_space<vmem>>) attributes {dimension_semantics = [#tpu.dimension_semantics<parallel>], iteration_bounds = array<i64: 1>, scalar_prefetch = 0 : i64, scratch_operands = 0 : i64, tpu.core_type = #tpu.core_type<tc>, window_params = [{transform_indices = @transform_0, window_bounds = array<i64: 8, 256>}, {pipeline_mode = #tpu.pipeline_mode<synchronous>, transform_indices = @transform_1, window_bounds = array<i64: 8, 256>}, {pipeline_mode = #tpu.pipeline_mode<synchronous>, transform_indices = @transform_2, window_bounds = array<i64: 8, 1>}, {transform_indices = @transform_3, window_bounds = array<i64: 8, 8>}]} {
    %c0 = arith.constant 0 : index
    %c0_0 = arith.constant 0 : index
    %0 = vector.load %arg2[%c0, %c0_0] : memref<8x256xf32, #tpu.memory_space<vmem>>, vector<8x256xf32>
    %c0_1 = arith.constant 0 : index
    %c0_2 = arith.constant 0 : index
    %1 = vector.load %arg1[%c0_1, %c0_2] : memref<8x256xf32, #tpu.memory_space<vmem>>, vector<8x256xf32>
    %cst = arith.constant dense<0.000000e+00> : vector<8x8xf32>
    %2 = tpu.matmul %0, %1, %cst {dimension_numbers = #tpu.dot_dimension_numbers<[1], [1], [0], [0], [0, 0, 1, 0], [], []>, precision = #tpu.contract_precision<fp32>} : vector<8x256xf32>, vector<8x256xf32>, vector<8x8xf32> -> vector<8x8xf32>
    %c0_3 = arith.constant 0 : index
    %c0_4 = arith.constant 0 : index
    %3 = vector.load %arg3[%c0_3, %c0_4] : memref<8x1xf32, #tpu.memory_space<vmem>>, vector<8x1xf32>
    %4 = vector.broadcast %3 : vector<8x1xf32> to vector<8x8xf32>
    %5 = arith.addf %2, %4 : vector<8x8xf32>
    %c0_5 = arith.constant 0 : index
    %c0_6 = arith.constant 0 : index
    %6 = vector.load %arg4[%c0_5, %c0_6] : memref<8x8xf32, #tpu.memory_space<vmem>>, vector<8x8xf32>
    tpu.vector_store %arg4[%c0_5, %c0_6], %5 {strides = array<i32>} : memref<8x8xf32, #tpu.memory_space<vmem>>, vector<8x8xf32>,
    return
  }
  func.func @transform_0(%arg0: i32) -> (i32, i32) {
    %c0_i32 = arith.constant 0 : i32
    %c0_i32_0 = arith.constant 0 : i32
    return %arg0, %c0_i32 : i32, i32
  }
  func.func @transform_1(%arg0: i32) -> (i32, i32) {
    %c0_i32 = arith.constant 0 : i32
    %c0_i32_0 = arith.constant 0 : i32
    %c0_i32_1 = arith.constant 0 : i32
    return %c0_i32, %c0_i32_0 : i32, i32
  }
  func.func @transform_2(%arg0: i32) -> (i32, i32) {
    %c0_i32 = arith.constant 0 : i32
    %c0_i32_0 = arith.constant 0 : i32
    %c0_i32_1 = arith.constant 0 : i32
    return %c0_i32, %c0_i32_0 : i32, i32
  }
  func.func @transform_3(%arg0: i32) -> (i32, i32) {
    %c0_i32 = arith.constant 0 : i32
    %c0_i32_0 = arith.constant 0 : i32
    return %c0_i32, %arg0 : i32, i32
  }
}

</mosaic_0001>

<llo_original>
// kernel: tpu_custom_call.1
$region0: #{tpu_custom_call.1}
  #allocation0 [shape = 'u32[]', space=smem, size = 0x4, offset = 0x4, fixed_abs, tag = 'smem constant byte address 0x4 - core index']
  #allocation1 [shape = 'u32[144,128]{1,0:T(1,128)}', space=vmem, size = 0x12000, scoped, tag = 'internal scratch']
  %s0 = inlined_call_operand.hbm [shape: f32[8,256], index: 0, kind: input, shape index: {}]
  %s1 = inlined_call_operand.hbm [shape: f32[8,256], index: 1, kind: input, shape index: {}]
  %s2 = inlined_call_operand.vmem [shape: f32[8,1], index: 2, kind: input, shape index: {}]
  %s3 = inlined_call_operand.hbm [shape: f32[8,8], index: 3, kind: output, shape index: {}]
  %s4 = sld [smem:[#allocation0]]
  $region30: #{tpu_custom_call.1} parent=0
    _
  %s6 = ssub.s32 1, %s4
  %s7 = scalar_select 0, %s6, %s4
  $region1: #{tpu_custom_call.1} parent=0
    #allocation2 [shape = 'u8[8192]{0}', space=vmem, size = 0x2000, scoped, tag = 'input window, operand 0, single buffered']
    #allocation3 [shape = 's32[1]{0}', space=sflag, size = 0x4, scoped, tag = 'scoped memory for tpu_custom_call.1']
    #allocation4 [shape = 's32[1]{0}', space=sflag, size = 0x4, scoped, tag = 'scoped memory for tpu_custom_call.1']
    #allocation5 [shape = 'u8[8192]{0}', space=vmem, size = 0x2000, scoped, tag = 'input window, operand 1, single buffered']
    #allocation6 [shape = 's32[1]{0}', space=sflag, size = 0x4, scoped, tag = 'scoped memory for tpu_custom_call.1']
    #allocation7 [shape = 'u8[4096]{0}', space=vmem, size = 0x1000, scoped, tag = 'output window, operand 0, single buffered']
    %8 = vsyncpa [#allocation3], 0
    %9 = vsyncpa [#allocation6], 0
    %10 = vsyncpa [#allocation4], 0
    // Predicated region
    $region2: #{tpu_custom_call.1} parent=1 // pred_check
      _
    $region3: #{tpu_custom_call.1} parent=1 // pred_check_branch
      %12 = sbr.rel (0) target = $region5
    $region4: #{tpu_custom_call.1} parent=1 // pred_region
      %s14 = ssub.s32 256, 256
      %15 = vsyncadd [#allocation3], %s14
      %s17 = sshll.u32 [#allocation2], 4
      %s18 = int_to_ptr.vmem [resolvable:$true] %s17
      %20 = dma.hbm_to_vmem [thread:$0]  %s0, 256, %s18, [#allocation3]
    $region5: #{tpu_custom_call.1} parent=1 // pred_fallthru
      _
    // Predicated region
    $region6: #{tpu_custom_call.1} parent=1 // pred_check
      _
    $region7: #{tpu_custom_call.1} parent=1 // pred_check_branch
      %22 = sbr.rel (0) target = $region9
    $region8: #{tpu_custom_call.1} parent=1 // pred_region
      %s24 = ssub.s32 256, 256
      %25 = vsyncadd [#allocation6], %s24
      %s27 = sshll.u32 [#allocation5], 4
      %s28 = int_to_ptr.vmem [resolvable:$true] %s27
      %30 = dma.hbm_to_vmem [thread:$0]  %s1, 256, %s28, [#allocation6]
    $region9: #{tpu_custom_call.1} parent=1 // pred_fallthru
      _
    // Predicated region
    $region10: #{tpu_custom_call.1} parent=1 // pred_check
      _
    $region11: #{tpu_custom_call.1} parent=1 // pred_check_branch
      %32 = sbr.rel (0) target = $region13
    $region12: #{tpu_custom_call.1} parent=1 // pred_region
      _
    $region13: #{tpu_custom_call.1} parent=1 // pred_fallthru
      _
    // Predicated region
    $region14: #{tpu_custom_call.1} parent=1 // pred_check
      _
    $region15: #{tpu_custom_call.1} parent=1 // pred_check_branch
      %34 = sbr.rel (0) target = $region17
    $region16: #{tpu_custom_call.1} parent=1 // pred_region
      %35 = dma.done [#allocation3], 256
    $region17: #{tpu_custom_call.1} parent=1 // pred_fallthru
      _
    // Predicated region
    $region18: #{tpu_custom_call.1} parent=1 // pred_check
      _
    $region19: #{tpu_custom_call.1} parent=1 // pred_check_branch
      %37 = sbr.rel (0) target = $region21
    $region20: #{tpu_custom_call.1} parent=1 // pred_region
      %38 = dma.done [#allocation6], 256
    $region21: #{tpu_custom_call.1} parent=1 // pred_fallthru
      _
    %v39 = vld [vmem:[#allocation5] sm:$0xff]
    %v40 = vld [vmem:[#allocation5 + $0x8] sm:$0xff]
    %v41 = vld [vmem:[#allocation2] sm:$0xff]
    %v42 = vld [vmem:[#allocation2 + $0x8] sm:$0xff]
    %v43 = vld [vmem:[%s2] sm:$0xff]
    %45 = vset.pattern.permute.xlu0 0
    %46 = vperm.xlu0 %45, %v43
    %v47 = vpop.permute.xlu0 %46
    %49 = vmatprep.subr.mxu0 0.0
    %50 = vmatpush1.xpose.msra.mxu0 0.0
    %51 = vmatprep.subr.mxu0 0.0
    %52 = vmatpush1.xpose.msra.mxu0 0.0
    %53 = vmatprep.subr.mxu0 0.0
    %54 = vmatpush1.xpose.msra.mxu0 0.0
    %55 = vmatprep.subr.mxu0 0.0
    %56 = vmatpush1.xpose.msra.mxu0 0.0
    %57 = vmatprep.subr.mxu0 0.0
    %58 = vmatpush1.xpose.msra.mxu0 0.0
    %59 = vmatprep.subr.mxu0 0.0
    %60 = vmatpush1.xpose.msra.mxu0 0.0
    %61 = vmatprep.subr.mxu0 0.0
    %62 = vmatpush1.xpose.msra.mxu0 0.0
    %63 = vmatprep.subr.mxu0 0.0
    %64 = vmatpush1.xpose.msra.mxu0 0.0
    %65 = vmatprep.subr.mxu0 0.0
    %66 = vmatpush1.xpose.msra.mxu0 0.0
    %67 = vmatprep.subr.mxu0 0.0
    %68 = vmatpush1.xpose.msra.mxu0 0.0
    %69 = vmatprep.subr.mxu0 0.0
    %70 = vmatpush1.xpose.msra.mxu0 0.0
    %71 = vmatprep.subr.mxu0 0.0
    %72 = vmatpush1.xpose.msra.mxu0 0.0
    %73 = vmatprep.subr.mxu0 0.0
    %74 = vmatpush1.xpose.msra.mxu0 0.0
    %75 = vmatprep.subr.mxu0 0.0
    %76 = vmatpush1.xpose.msra.mxu0 0.0
    %77 = vmatprep.subr.mxu0 0.0
    %78 = vmatpush1.xpose.msra.mxu0 0.0
    %v79 = vand.u32 %v42, 4294901760
    %80 = vmatprep.subr.mxu0 %v79
    %v81 = vand.u32 %v41, 4294901760
    %82 = vmatpush1.xpose.msra.mxu0 %v81
    %83 = vmatprep.subr.mxu0 0.0
    %84 = vmatpush2.xpose.msra.mxu0 0.0
    %85 = vmatprep.subr.mxu0 0.0
    %86 = vmatpush2.xpose.msra.mxu0 0.0
    %87 = vmatprep.subr.mxu0 0.0
    %88 = vmatpush2.xpose.msra.mxu0 0.0
    %89 = vmatprep.subr.mxu0 0.0
    %90 = vmatpush2.xpose.msra.mxu0 0.0
    %91 = vmatprep.subr.mxu0 0.0
    %92 = vmatpush2.xpose.msra.mxu0 0.0
    %93 = vmatprep.subr.mxu0 0.0
    %94 = vmatpush2.xpose.msra.mxu0 0.0
    %95 = vmatprep.subr.mxu0 0.0
    %96 = vmatpush2.xpose.msra.mxu0 0.0
    %97 = vmatprep.subr.mxu0 0.0
    %98 = vmatpush2.xpose.msra.mxu0 0.0
    %99 = vmatprep.subr.mxu0 0.0
    %100 = vmatpush2.xpose.msra.mxu0 0.0
    %101 = vmatprep.subr.mxu0 0.0
    %102 = vmatpush2.xpose.msra.mxu0 0.0
    %103 = vmatprep.subr.mxu0 0.0
    %104 = vmatpush2.xpose.msra.mxu0 0.0
    %105 = vmatprep.subr.mxu0 0.0
    %106 = vmatpush2.xpose.msra.mxu0 0.0
    %107 = vmatprep.subr.mxu0 0.0
    %108 = vmatpush2.xpose.msra.mxu0 0.0
    %109 = vmatprep.subr.mxu0 0.0
    %110 = vmatpush2.xpose.msra.mxu0 0.0
    %111 = vmatprep.subr.mxu0 0.0
    %112 = vmatpush2.xpose.msra.mxu0 0.0
    %113 = vmatprep.subr.mxu0 0.0
    %114 = vmatpush2.xpose.msra.mxu0 0.0
    %v115 = vand.u32 %v40, 4294901760
    %v116 = vsub.f32 %v40, %v115
    %v117 = vand.u32 %v116, 4294901760
    %v118 = vsub.f32 %v116, %v117
    %v119 = vand.u32 %v118, 4294901760
    %120 = vmatprep.mubr.f32.mxu0 %v119
    %v121 = vand.u32 %v39, 4294901760
    %v122 = vsub.f32 %v39, %v121
    %v123 = vand.u32 %v122, 4294901760
    %v124 = vsub.f32 %v122, %v123
    %v125 = vand.u32 %v124, 4294901760
    %126 = vmatmul.mubr.f32.gmra.mxu0 %v125
    %v127 = vpop.f32.mrf.mxu0
    %v128 = vadd.f32 %v47, %v127
    %v129 = vpop.f32.mrf.mxu0
    %130 = vdwg.mxu0
    %131 = vmatprep.subr.mxu0 0.0
    %132 = vmatpush1.xpose.msra.mxu0 0.0
    %133 = vmatprep.subr.mxu0 0.0
    %134 = vmatpush1.xpose.msra.mxu0 0.0
    %135 = vmatprep.subr.mxu0 0.0
    %136 = vmatpush1.xpose.msra.mxu0 0.0
    %137 = vmatprep.subr.mxu0 0.0
    %138 = vmatpush1.xpose.msra.mxu0 0.0
    %139 = vmatprep.subr.mxu0 0.0
    %140 = vmatpush1.xpose.msra.mxu0 0.0
    %141 = vmatprep.subr.mxu0 0.0
    %142 = vmatpush1.xpose.msra.mxu0 0.0
    %143 = vmatprep.subr.mxu0 0.0
    %144 = vmatpush1.xpose.msra.mxu0 0.0
    %145 = vmatprep.subr.mxu0 0.0
    %146 = vmatpush1.xpose.msra.mxu0 0.0
    %147 = vmatprep.subr.mxu0 0.0
    %148 = vmatpush1.xpose.msra.mxu0 0.0
    %149 = vmatprep.subr.mxu0 0.0
    %150 = vmatpush1.xpose.msra.mxu0 0.0
    %151 = vmatprep.subr.mxu0 0.0
    %152 = vmatpush1.xpose.msra.mxu0 0.0
    %153 = vmatprep.subr.mxu0 0.0
    %154 = vmatpush1.xpose.msra.mxu0 0.0
    %155 = vmatprep.subr.mxu0 0.0
    %156 = vmatpush1.xpose.msra.mxu0 0.0
    %157 = vmatprep.subr.mxu0 0.0
    %158 = vmatpush1.xpose.msra.mxu0 0.0
    %159 = vmatprep.subr.mxu0 0.0
    %160 = vmatpush1.xpose.msra.mxu0 0.0
    %v161 = vand.u32 %v42, 4294901760
    %v162 = vsub.f32 %v42, %v161
    %v163 = vand.u32 %v162, 4294901760
    %v164 = vsub.f32 %v162, %v163
    %v165 = vand.u32 %v164, 4294901760
    %166 = vmatprep.subr.mxu0 %v165
    %v167 = vand.u32 %v41, 4294901760
    %v168 = vsub.f32 %v41, %v167
    %v169 = vand.u32 %v168, 4294901760
    %v170 = vsub.f32 %v168, %v169
    %v171 = vand.u32 %v170, 4294901760
    %172 = vmatpush1.xpose.msra.mxu0 %v171
    %173 = vmatprep.subr.mxu0 0.0
    %174 = vmatpush2.xpose.msra.mxu0 0.0
    %175 = vmatprep.subr.mxu0 0.0
    %176 = vmatpush2.xpose.msra.mxu0 0.0
    %177 = vmatprep.subr.mxu0 0.0
    %178 = vmatpush2.xpose.msra.mxu0 0.0
    %179 = vmatprep.subr.mxu0 0.0
    %180 = vmatpush2.xpose.msra.mxu0 0.0
    %181 = vmatprep.subr.mxu0 0.0
    %182 = vmatpush2.xpose.msra.mxu0 0.0
    %183 = vmatprep.subr.mxu0 0.0
    %184 = vmatpush2.xpose.msra.mxu0 0.0
    %185 = vmatprep.subr.mxu0 0.0
    %186 = vmatpush2.xpose.msra.mxu0 0.0
    %187 = vmatprep.subr.mxu0 0.0
    %188 = vmatpush2.xpose.msra.mxu0 0.0
    %189 = vmatprep.subr.mxu0 0.0
    %190 = vmatpush2.xpose.msra.mxu0 0.0
    %191 = vmatprep.subr.mxu0 0.0
    %192 = vmatpush2.xpose.msra.mxu0 0.0
    %193 = vmatprep.subr.mxu0 0.0
    %194 = vmatpush2.xpose.msra.mxu0 0.0
    %195 = vmatprep.subr.mxu0 0.0
    %196 = vmatpush2.xpose.msra.mxu0 0.0
    %197 = vmatprep.subr.mxu0 0.0
    %198 = vmatpush2.xpose.msra.mxu0 0.0
    %199 = vmatprep.subr.mxu0 0.0
    %200 = vmatpush2.xpose.msra.mxu0 0.0
    %201 = vmatprep.subr.mxu0 0.0
    %202 = vmatpush2.xpose.msra.mxu0 0.0
    %203 = vmatprep.subr.mxu0 0.0
    %204 = vmatpush2.xpose.msra.mxu0 0.0
    %v205 = vand.u32 %v40, 4294901760
    %206 = vmatprep.mubr.f32.mxu0 %v205
    %v207 = vand.u32 %v39, 4294901760
    %208 = vmatmul.mubr.f32.gmra.mxu0 %v207
    %v209 = vpop.f32.mrf.mxu0
    %v210 = vadd.f32 %v128, %v209
    %v211 = vpop.f32.mrf.mxu0
    %212 = vdwg.mxu0
    %213 = vmatprep.subr.mxu0 0.0
    %214 = vmatpush1.xpose.msra.mxu0 0.0
    %215 = vmatprep.subr.mxu0 0.0
    %216 = vmatpush1.xpose.msra.mxu0 0.0
    %217 = vmatprep.subr.mxu0 0.0
    %218 = vmatpush1.xpose.msra.mxu0 0.0
    %219 = vmatprep.subr.mxu0 0.0
    %220 = vmatpush1.xpose.msra.mxu0 0.0
    %221 = vmatprep.subr.mxu0 0.0
    %222 = vmatpush1.xpose.msra.mxu0 0.0
    %223 = vmatprep.subr.mxu0 0.0
    %224 = vmatpush1.xpose.msra.mxu0 0.0
    %225 = vmatprep.subr.mxu0 0.0
    %226 = vmatpush1.xpose.msra.mxu0 0.0
    %227 = vmatprep.subr.mxu0 0.0
    %228 = vmatpush1.xpose.msra.mxu0 0.0
    %229 = vmatprep.subr.mxu0 0.0
    %230 = vmatpush1.xpose.msra.mxu0 0.0
    %231 = vmatprep.subr.mxu0 0.0
    %232 = vmatpush1.xpose.msra.mxu0 0.0
    %233 = vmatprep.subr.mxu0 0.0
    %234 = vmatpush1.xpose.msra.mxu0 0.0
    %235 = vmatprep.subr.mxu0 0.0
    %236 = vmatpush1.xpose.msra.mxu0 0.0
    %237 = vmatprep.subr.mxu0 0.0
    %238 = vmatpush1.xpose.msra.mxu0 0.0
    %239 = vmatprep.subr.mxu0 0.0
    %240 = vmatpush1.xpose.msra.mxu0 0.0
    %241 = vmatprep.subr.mxu0 0.0
    %242 = vmatpush1.xpose.msra.mxu0 0.0
    %v243 = vand.u32 %v42, 4294901760
    %v244 = vsub.f32 %v42, %v243
    %245 = vmatprep.subr.mxu0 %v244
    %v246 = vand.u32 %v41, 4294901760
    %v247 = vsub.f32 %v41, %v246
    %248 = vmatpush1.xpose.msra.mxu0 %v247
    %249 = vmatprep.subr.mxu0 0.0
    %250 = vmatpush2.xpose.msra.mxu0 0.0
    %251 = vmatprep.subr.mxu0 0.0
    %252 = vmatpush2.xpose.msra.mxu0 0.0
    %253 = vmatprep.subr.mxu0 0.0
    %254 = vmatpush2.xpose.msra.mxu0 0.0
    %255 = vmatprep.subr.mxu0 0.0
    %256 = vmatpush2.xpose.msra.mxu0 0.0
    %257 = vmatprep.subr.mxu0 0.0
    %258 = vmatpush2.xpose.msra.mxu0 0.0
    %259 = vmatprep.subr.mxu0 0.0
    %260 = vmatpush2.xpose.msra.mxu0 0.0
    %261 = vmatprep.subr.mxu0 0.0
    %262 = vmatpush2.xpose.msra.mxu0 0.0
    %263 = vmatprep.subr.mxu0 0.0
    %264 = vmatpush2.xpose.msra.mxu0 0.0
    %265 = vmatprep.subr.mxu0 0.0
    %266 = vmatpush2.xpose.msra.mxu0 0.0
    %267 = vmatprep.subr.mxu0 0.0
    %268 = vmatpush2.xpose.msra.mxu0 0.0
    %269 = vmatprep.subr.mxu0 0.0
    %270 = vmatpush2.xpose.msra.mxu0 0.0
    %271 = vmatprep.subr.mxu0 0.0
    %272 = vmatpush2.xpose.msra.mxu0 0.0
    %273 = vmatprep.subr.mxu0 0.0
    %274 = vmatpush2.xpose.msra.mxu0 0.0
    %275 = vmatprep.subr.mxu0 0.0
    %276 = vmatpush2.xpose.msra.mxu0 0.0
    %277 = vmatprep.subr.mxu0 0.0
    %278 = vmatpush2.xpose.msra.mxu0 0.0
    %279 = vmatprep.subr.mxu0 0.0
    %280 = vmatpush2.xpose.msra.mxu0 0.0
    %v281 = vand.u32 %v40, 4294901760
    %v282 = vsub.f32 %v40, %v281
    %283 = vmatprep.mubr.f32.mxu0 %v282
    %v284 = vand.u32 %v39, 4294901760
    %v285 = vsub.f32 %v39, %v284
    %286 = vmatmul.mubr.f32.gmra.mxu0 %v285
    %v287 = vpop.f32.mrf.mxu0
    %v288 = vadd.f32 %v210, %v287
    %v289 = vpop.f32.mrf.mxu0
    %290 = vdwg.mxu0
    %291 = vmatprep.subr.mxu0 0.0
    %292 = vmatpush1.xpose.msra.mxu0 0.0
    %293 = vmatprep.subr.mxu0 0.0
    %294 = vmatpush1.xpose.msra.mxu0 0.0
    %295 = vmatprep.subr.mxu0 0.0
    %296 = vmatpush1.xpose.msra.mxu0 0.0
    %297 = vmatprep.subr.mxu0 0.0
    %298 = vmatpush1.xpose.msra.mxu0 0.0
    %299 = vmatprep.subr.mxu0 0.0
    %300 = vmatpush1.xpose.msra.mxu0 0.0
    %301 = vmatprep.subr.mxu0 0.0
    %302 = vmatpush1.xpose.msra.mxu0 0.0
    %303 = vmatprep.subr.mxu0 0.0
    %304 = vmatpush1.xpose.msra.mxu0 0.0
    %305 = vmatprep.subr.mxu0 0.0
    %306 = vmatpush1.xpose.msra.mxu0 0.0
    %307 = vmatprep.subr.mxu0 0.0
    %308 = vmatpush1.xpose.msra.mxu0 0.0
    %309 = vmatprep.subr.mxu0 0.0
    %310 = vmatpush1.xpose.msra.mxu0 0.0
    %311 = vmatprep.subr.mxu0 0.0
    %312 = vmatpush1.xpose.msra.mxu0 0.0
    %313 = vmatprep.subr.mxu0 0.0
    %314 = vmatpush1.xpose.msra.mxu0 0.0
    %315 = vmatprep.subr.mxu0 0.0
    %316 = vmatpush1.xpose.msra.mxu0 0.0
    %317 = vmatprep.subr.mxu0 0.0
    %318 = vmatpush1.xpose.msra.mxu0 0.0
    %319 = vmatprep.subr.mxu0 0.0
    %320 = vmatpush1.xpose.msra.mxu0 0.0
    %v321 = vand.u32 %v42, 4294901760
    %322 = vmatprep.subr.mxu0 %v321
    %v323 = vand.u32 %v41, 4294901760
    %324 = vmatpush1.xpose.msra.mxu0 %v323
    %325 = vmatprep.subr.mxu0 0.0
    %326 = vmatpush2.xpose.msra.mxu0 0.0
    %327 = vmatprep.subr.mxu0 0.0
    %328 = vmatpush2.xpose.msra.mxu0 0.0
    %329 = vmatprep.subr.mxu0 0.0
    %330 = vmatpush2.xpose.msra.mxu0 0.0
    %331 = vmatprep.subr.mxu0 0.0
    %332 = vmatpush2.xpose.msra.mxu0 0.0
    %333 = vmatprep.subr.mxu0 0.0
    %334 = vmatpush2.xpose.msra.mxu0 0.0
    %335 = vmatprep.subr.mxu0 0.0
    %336 = vmatpush2.xpose.msra.mxu0 0.0
    %337 = vmatprep.subr.mxu0 0.0
    %338 = vmatpush2.xpose.msra.mxu0 0.0
    %339 = vmatprep.subr.mxu0 0.0
    %340 = vmatpush2.xpose.msra.mxu0 0.0
    %341 = vmatprep.subr.mxu0 0.0
    %342 = vmatpush2.xpose.msra.mxu0 0.0
    %343 = vmatprep.subr.mxu0 0.0
    %344 = vmatpush2.xpose.msra.mxu0 0.0
    %345 = vmatprep.subr.mxu0 0.0
    %346 = vmatpush2.xpose.msra.mxu0 0.0
    %347 = vmatprep.subr.mxu0 0.0
    %348 = vmatpush2.xpose.msra.mxu0 0.0
    %349 = vmatprep.subr.mxu0 0.0
    %350 = vmatpush2.xpose.msra.mxu0 0.0
    %351 = vmatprep.subr.mxu0 0.0
    %352 = vmatpush2.xpose.msra.mxu0 0.0
    %353 = vmatprep.subr.mxu0 0.0
    %354 = vmatpush2.xpose.msra.mxu0 0.0
    %355 = vmatprep.subr.mxu0 0.0
    %356 = vmatpush2.xpose.msra.mxu0 0.0
    %v357 = vand.u32 %v40, 4294901760
    %v358 = vsub.f32 %v40, %v357
    %v359 = vand.u32 %v358, 4294901760
    %360 = vmatprep.mubr.f32.mxu0 %v359
    %v361 = vand.u32 %v39, 4294901760
    %v362 = vsub.f32 %v39, %v361
    %v363 = vand.u32 %v362, 4294901760
    %364 = vmatmul.mubr.f32.gmra.mxu0 %v363
    %v365 = vpop.f32.mrf.mxu0
    %v366 = vadd.f32 %v288, %v365
    %v367 = vpop.f32.mrf.mxu0
    %368 = vdwg.mxu0
    %369 = vmatprep.subr.mxu0 0.0
    %370 = vmatpush1.xpose.msra.mxu0 0.0
    %371 = vmatprep.subr.mxu0 0.0
    %372 = vmatpush1.xpose.msra.mxu0 0.0
    %373 = vmatprep.subr.mxu0 0.0
    %374 = vmatpush1.xpose.msra.mxu0 0.0
    %375 = vmatprep.subr.mxu0 0.0
    %376 = vmatpush1.xpose.msra.mxu0 0.0
    %377 = vmatprep.subr.mxu0 0.0
    %378 = vmatpush1.xpose.msra.mxu0 0.0
    %379 = vmatprep.subr.mxu0 0.0
    %380 = vmatpush1.xpose.msra.mxu0 0.0
    %381 = vmatprep.subr.mxu0 0.0
    %382 = vmatpush1.xpose.msra.mxu0 0.0
    %383 = vmatprep.subr.mxu0 0.0
    %384 = vmatpush1.xpose.msra.mxu0 0.0
    %385 = vmatprep.subr.mxu0 0.0
    %386 = vmatpush1.xpose.msra.mxu0 0.0
    %387 = vmatprep.subr.mxu0 0.0
    %388 = vmatpush1.xpose.msra.mxu0 0.0
    %389 = vmatprep.subr.mxu0 0.0
    %390 = vmatpush1.xpose.msra.mxu0 0.0
    %391 = vmatprep.subr.mxu0 0.0
    %392 = vmatpush1.xpose.msra.mxu0 0.0
    %393 = vmatprep.subr.mxu0 0.0
    %394 = vmatpush1.xpose.msra.mxu0 0.0
    %395 = vmatprep.subr.mxu0 0.0
    %396 = vmatpush1.xpose.msra.mxu0 0.0
    %397 = vmatprep.subr.mxu0 0.0
    %398 = vmatpush1.xpose.msra.mxu0 0.0
    %v399 = vand.u32 %v42, 4294901760
    %v400 = vsub.f32 %v42, %v399
    %v401 = vand.u32 %v400, 4294901760
    %402 = vmatprep.subr.mxu0 %v401
    %v403 = vand.u32 %v41, 4294901760
    %v404 = vsub.f32 %v41, %v403
    %v405 = vand.u32 %v404, 4294901760
    %406 = vmatpush1.xpose.msra.mxu0 %v405
    %407 = vmatprep.subr.mxu0 0.0
    %408 = vmatpush2.xpose.msra.mxu0 0.0
    %409 = vmatprep.subr.mxu0 0.0
    %410 = vmatpush2.xpose.msra.mxu0 0.0
    %411 = vmatprep.subr.mxu0 0.0
    %412 = vmatpush2.xpose.msra.mxu0 0.0
    %413 = vmatprep.subr.mxu0 0.0
    %414 = vmatpush2.xpose.msra.mxu0 0.0
    %415 = vmatprep.subr.mxu0 0.0
    %416 = vmatpush2.xpose.msra.mxu0 0.0
    %417 = vmatprep.subr.mxu0 0.0
    %418 = vmatpush2.xpose.msra.mxu0 0.0
    %419 = vmatprep.subr.mxu0 0.0
    %420 = vmatpush2.xpose.msra.mxu0 0.0
    %421 = vmatprep.subr.mxu0 0.0
    %422 = vmatpush2.xpose.msra.mxu0 0.0
    %423 = vmatprep.subr.mxu0 0.0
    %424 = vmatpush2.xpose.msra.mxu0 0.0
    %425 = vmatprep.subr.mxu0 0.0
    %426 = vmatpush2.xpose.msra.mxu0 0.0
    %427 = vmatprep.subr.mxu0 0.0
    %428 = vmatpush2.xpose.msra.mxu0 0.0
    %429 = vmatprep.subr.mxu0 0.0
    %430 = vmatpush2.xpose.msra.mxu0 0.0
    %431 = vmatprep.subr.mxu0 0.0
    %432 = vmatpush2.xpose.msra.mxu0 0.0
    %433 = vmatprep.subr.mxu0 0.0
    %434 = vmatpush2.xpose.msra.mxu0 0.0
    %435 = vmatprep.subr.mxu0 0.0
    %436 = vmatpush2.xpose.msra.mxu0 0.0
    %437 = vmatprep.subr.mxu0 0.0
    %438 = vmatpush2.xpose.msra.mxu0 0.0
    %v439 = vand.u32 %v40, 4294901760
    %440 = vmatprep.mubr.f32.mxu0 %v439
    %v441 = vand.u32 %v39, 4294901760
    %442 = vmatmul.mubr.f32.gmra.mxu0 %v441
    %v443 = vpop.f32.mrf.mxu0
    %v444 = vadd.f32 %v366, %v443
    %v445 = vpop.f32.mrf.mxu0
    %446 = vdwg.mxu0
    %447 = vmatprep.subr.mxu0 0.0
    %448 = vmatpush1.xpose.msra.mxu0 0.0
    %449 = vmatprep.subr.mxu0 0.0
    %450 = vmatpush1.xpose.msra.mxu0 0.0
    %451 = vmatprep.subr.mxu0 0.0
    %452 = vmatpush1.xpose.msra.mxu0 0.0
    %453 = vmatprep.subr.mxu0 0.0
    %454 = vmatpush1.xpose.msra.mxu0 0.0
    %455 = vmatprep.subr.mxu0 0.0
    %456 = vmatpush1.xpose.msra.mxu0 0.0
    %457 = vmatprep.subr.mxu0 0.0
    %458 = vmatpush1.xpose.msra.mxu0 0.0
    %459 = vmatprep.subr.mxu0 0.0
    %460 = vmatpush1.xpose.msra.mxu0 0.0
    %461 = vmatprep.subr.mxu0 0.0
    %462 = vmatpush1.xpose.msra.mxu0 0.0
    %463 = vmatprep.subr.mxu0 0.0
    %464 = vmatpush1.xpose.msra.mxu0 0.0
    %465 = vmatprep.subr.mxu0 0.0
    %466 = vmatpush1.xpose.msra.mxu0 0.0
    %467 = vmatprep.subr.mxu0 0.0
    %468 = vmatpush1.xpose.msra.mxu0 0.0
    %469 = vmatprep.subr.mxu0 0.0
    %470 = vmatpush1.xpose.msra.mxu0 0.0
    %471 = vmatprep.subr.mxu0 0.0
    %472 = vmatpush1.xpose.msra.mxu0 0.0
    %473 = vmatprep.subr.mxu0 0.0
    %474 = vmatpush1.xpose.msra.mxu0 0.0
    %475 = vmatprep.subr.mxu0 0.0
    %476 = vmatpush1.xpose.msra.mxu0 0.0
    %v477 = vand.u32 %v42, 4294901760
    %478 = vmatprep.subr.mxu0 %v477
    %v479 = vand.u32 %v41, 4294901760
    %480 = vmatpush1.xpose.msra.mxu0 %v479
    %481 = vmatprep.subr.mxu0 0.0
    %482 = vmatpush2.xpose.msra.mxu0 0.0
    %483 = vmatprep.subr.mxu0 0.0
    %484 = vmatpush2.xpose.msra.mxu0 0.0
    %485 = vmatprep.subr.mxu0 0.0
    %486 = vmatpush2.xpose.msra.mxu0 0.0
    %487 = vmatprep.subr.mxu0 0.0
    %488 = vmatpush2.xpose.msra.mxu0 0.0
    %489 = vmatprep.subr.mxu0 0.0
    %490 = vmatpush2.xpose.msra.mxu0 0.0
    %491 = vmatprep.subr.mxu0 0.0
    %492 = vmatpush2.xpose.msra.mxu0 0.0
    %493 = vmatprep.subr.mxu0 0.0
    %494 = vmatpush2.xpose.msra.mxu0 0.0
    %495 = vmatprep.subr.mxu0 0.0
    %496 = vmatpush2.xpose.msra.mxu0 0.0
    %497 = vmatprep.subr.mxu0 0.0
    %498 = vmatpush2.xpose.msra.mxu0 0.0
    %499 = vmatprep.subr.mxu0 0.0
    %500 = vmatpush2.xpose.msra.mxu0 0.0
    %501 = vmatprep.subr.mxu0 0.0
    %502 = vmatpush2.xpose.msra.mxu0 0.0
    %503 = vmatprep.subr.mxu0 0.0
    %504 = vmatpush2.xpose.msra.mxu0 0.0
    %505 = vmatprep.subr.mxu0 0.0
    %506 = vmatpush2.xpose.msra.mxu0 0.0
    %507 = vmatprep.subr.mxu0 0.0
    %508 = vmatpush2.xpose.msra.mxu0 0.0
    %509 = vmatprep.subr.mxu0 0.0
    %510 = vmatpush2.xpose.msra.mxu0 0.0
    %511 = vmatprep.subr.mxu0 0.0
    %512 = vmatpush2.xpose.msra.mxu0 0.0
    %v513 = vand.u32 %v40, 4294901760
    %514 = vmatprep.mubr.f32.mxu0 %v513
    %v515 = vand.u32 %v39, 4294901760
    %516 = vmatmul.mubr.f32.gmra.mxu0 %v515
    %v517 = vpop.f32.mrf.mxu0
    %v518 = vadd.f32 %v444, %v517
    %v519 = vpop.f32.mrf.mxu0
    %520 = vdwg.mxu0
    %vm521 = vcmask 64512
    %522 = vst.msk [vmem:[#allocation7] sm:$0xff] %vm521, %v518
    // Predicated region
    $region22: #{tpu_custom_call.1} parent=1 // pred_check
      _
    $region23: #{tpu_custom_call.1} parent=1 // pred_check_branch
      %524 = sbr.rel (0) target = $region25
    $region24: #{tpu_custom_call.1} parent=1 // pred_region
      %s526 = ssub.s32 128, 128
      %527 = vsyncadd [#allocation4], %s526
      %s529 = sshll.u32 [#allocation7], 4
      %s530 = int_to_ptr.vmem [resolvable:$true] %s529
      %532 = dma.vmem_to_hbm [thread:$0]  %s530, 128, %s3, [#allocation4]
    $region25: #{tpu_custom_call.1} parent=1 // pred_fallthru
      _
    // Predicated region
    $region26: #{tpu_custom_call.1} parent=1 // pred_check
      _
    $region27: #{tpu_custom_call.1} parent=1 // pred_check_branch
      %534 = sbr.rel (0) target = $region29
    $region28: #{tpu_custom_call.1} parent=1 // pred_region
      %535 = dma.done [#allocation4], 128
    $region29: #{tpu_custom_call.1} parent=1 // pred_fallthru
      _
    %536 = vsyncpa [#allocation3], 1
    %537 = vsyncpa [#allocation6], 1
    %538 = vsyncpa [#allocation4], 1

</llo_original>
